<compile_context>
chip_gen: v7x
topology: tpu7x:2x2x1
jax: 0.10.0
libtpu: 0.0.40
codegen_flags: <defaults>
</compile_context>

<pallas_src>
import functools

import jax
import jax.numpy as jnp
from jax import lax
from jax.experimental import pallas as pl
from jax.experimental.pallas import tpu as pltpu


def _round_up(x, m):
    return (x + m - 1) // m * m


@functools.lru_cache(maxsize=1)
def _roll_matches_jnp() -> bool:
    """One-time (trace-time) probe of pltpu.roll's direction convention."""
    def probe(x_ref, o_ref):
        o_ref[...] = pltpu.roll(x_ref[...], 1, 1)

    x = jnp.broadcast_to(lax.iota(jnp.float32, 128)[None, :], (8, 128))
    y = pl.pallas_call(
        probe, out_shape=jax.ShapeDtypeStruct((8, 128), jnp.float32))(x)
    return bool(y[0, 0] == 127.0)   # jnp.roll(x, 1, axis=1)[..., 0] == x[..., -1]


# ------------------------------- the kernel ---------------------------------

def _basic_block_kernel(x_ref, m_ref,
                        s1_ref, b1_ref, w1_ref,
                        b2_ref, w2_ref,
                        b3_ref, w3_ref,
                        o_ref, col_ref, *,
                        K, cin_p, cout_p, res, roll_like_jnp):
    lanes = x_ref.shape[-1]
    pad = (K - 1) // 2

    def conv(hb, w_ref_, c):
        """hb: (c, lanes) bf16 -> (cout_p, lanes) f32 via one MXU matmul.

        Rolled + masked taps are written straight into the persistent im2col
        scratch (no concatenate materialization)."""
        for k in range(K):
            d = k - pad
            if d == 0:
                t = hb
            else:
                shift = (-d) % lanes if roll_like_jnp else d % lanes
                m = m_ref[k:k + 1, :].astype(jnp.bfloat16)       # (1, lanes)
                t = pltpu.roll(hb, shift, 1) * m                 # XLU + bf16 VPU
            col_ref[k * c:(k + 1) * c, :] = t
        return jnp.dot(w_ref_[...], col_ref[0:K * c, :],
                       preferred_element_type=jnp.float32)

    # bn1 + relu (bf16 elementwise); bn2/bn3 scales are folded into w1/w2.
    a = jnp.maximum(x_ref[...] * s1_ref[...] + b1_ref[...], 0)
    h = conv(a, w1_ref, cin_p)                                   # conv1 (s2-folded)
    a = jnp.maximum(h.astype(jnp.bfloat16) + b2_ref[...], 0)     # bn2 shift + relu
    h = conv(a, w2_ref, cout_p)                                  # conv2 (s3-folded)
    a = jnp.maximum(h.astype(jnp.bfloat16) + b3_ref[...], 0)     # bn3 shift + relu
    h = conv(a, w3_ref, cout_p)                                  # conv3
    if res:
        h = h + x_ref[...].astype(jnp.float32)                   # residual (f32)
    o_ref[...] = h.astype(o_ref.dtype)


# ------------------------------- the wrapper ---------------------------------

def _choose_batch_block(N, L, cin_p, cout_p, K, budget_bytes=16 * 1024 * 1024):
    """Pick batch elements per grid step: prefer >=2 (ideally >=4) grid steps
    with ~1k-8k lane-wide blocks, under a conservative VMEM budget."""
    c_max = max(cin_p, cout_p)
    # Conservative bytes per lane column: double-buffered bf16 in/out blocks,
    # f32 masks, bf16 activation + rolled taps, f32 conv result, im2col scratch.
    per_col = (6 * cin_p + 8 * cout_p + (2 * K + 6) * c_max + 8 * K)

    def lanes_of(b):
        return _round_up(b * L, 128)

    candidates = [b for b in range(1, N + 1) if N % b == 0]
    feasible = [b for b in candidates if lanes_of(b) * per_col <= budget_bytes]
    if not feasible:
        # TODO(synk): even one batch element exceeds the budget (huge C*L);
        # an L-tiled halo scheme would be needed.  Take the smallest block and
        # let vmem_limit_bytes absorb the overshoot.
        feasible = [1]

    def score(b):
        g = N // b
        lanes = lanes_of(b)
        return (g >= 2,                    # >=2 steps: v7x megacore sharding
                1024 <= lanes <= 8192,     # lane-dense yet pipeline-friendly
                g >= 4,                    # enough steps to hide DMA
                -lanes,                    # prefer more, smaller steps
                b)                         # then least padding waste
    return max(feasible, key=score), per_col


def basic_block_1d(x, params, *, res=True):
    """x: (N, Cin, L) float32.  params: folded BN scale/shift + conv weights."""
    N, Cin, L = x.shape
    w1, w2, w3 = params["w1"], params["w2"], params["w3"]
    planes, _, K = w1.shape
    if K % 2 != 1:
        raise NotImplementedError("only odd kernel sizes ('same' padding)")
    if res and planes != Cin:
        raise NotImplementedError("res=True requires planes == inplanes")

    cin_p = _round_up(Cin, 16)
    cout_p = _round_up(planes, 16)
    c_max = max(cin_p, cout_p)

    b_blk, per_col = _choose_batch_block(N, L, cin_p, cout_p, K)
    grid_len = N // b_blk
    lanes = _round_up(b_blk * L, 128)          # per-block lane extent (128-mult)
    pad = (K - 1) // 2

    # --- activations: (N, Cin, L) -> (Cin_p, grid_len*lanes), bf16 ------------
    x_cl = jnp.transpose(x, (1, 0, 2)).reshape(Cin, grid_len, b_blk * L)
    x_cl = jnp.pad(x_cl, ((0, cin_p - Cin), (0, 0), (0, lanes - b_blk * L)))
    x_cl = x_cl.reshape(cin_p, grid_len * lanes).astype(jnp.bfloat16)

    # --- per-tap boundary masks (host precomputed, grid-invariant) ------------
    pos = jnp.arange(lanes, dtype=jnp.int32) % L
    offs = jnp.arange(K, dtype=jnp.int32)[:, None] - pad
    masks = (((pos[None, :] + offs) >= 0)
             & ((pos[None, :] + offs) < L)).astype(jnp.float32)   # (K, lanes)

    # --- BN params: (C,1), bf16; bn2/bn3 scales folded into the weights -------
    def pad_cvec(v, c_p):
        return jnp.pad(v.astype(jnp.float32),
                       ((0, c_p - v.shape[0]), (0, 0))).astype(jnp.bfloat16)

    s1 = pad_cvec(params["s1"], cin_p)
    b1 = pad_cvec(params["b1"], cin_p)
    b2 = pad_cvec(params["b2"], cout_p)
    b3 = pad_cvec(params["b3"], cout_p)

    # --- conv weights -> lane-dense im2col (Cout_p, K*Cin_p) bf16 -------------
    def flat_w(w, cout_pad, cin_pad):
        cout, cin, k = w.shape
        w = jnp.pad(w, ((0, cout_pad - cout), (0, cin_pad - cin), (0, 0)))
        return jnp.transpose(w, (0, 2, 1)).reshape(
            cout_pad, k * cin_pad).astype(jnp.bfloat16)

    s2 = params["s2"].astype(jnp.float32)      # (planes, 1)
    s3 = params["s3"].astype(jnp.float32)
    w1f = flat_w(w1.astype(jnp.float32) * s2[:, :, None], cout_p, cin_p)
    w2f = flat_w(w2.astype(jnp.float32) * s3[:, :, None], cout_p, cout_p)
    w3f = flat_w(w3.astype(jnp.float32), cout_p, cout_p)

    # --- VMEM limit: estimate + headroom, capped below v7x's 64 MiB/TC --------
    est_bytes = (lanes * per_col
                 + 4 * (w1f.size + w2f.size + w3f.size)   # bf16, double-buffered
                 + (2 << 20))                             # Mosaic internal slack
    vmem_limit = int(min(56 * 2**20, max(32 * 2**20, int(1.4 * est_bytes))))

    def const_spec(a):          # grid-invariant full-array block (DMA'd once)
        return pl.BlockSpec(a.shape, lambda g: (0, 0))

    kernel = functools.partial(
        _basic_block_kernel, K=K, cin_p=cin_p, cout_p=cout_p, res=res,
        roll_like_jnp=_roll_matches_jnp())

    out_flat = pl.pallas_call(
        kernel,
        out_shape=jax.ShapeDtypeStruct((cout_p, grid_len * lanes), jnp.bfloat16),
        grid_spec=pltpu.PrefetchScalarGridSpec(
            num_scalar_prefetch=0,
            grid=(grid_len,),
            in_specs=[
                pl.BlockSpec((cin_p, lanes), lambda g: (0, g)),
                const_spec(masks),
                const_spec(s1), const_spec(b1), const_spec(w1f),
                const_spec(b2), const_spec(w2f),
                const_spec(b3), const_spec(w3f),
            ],
            out_specs=pl.BlockSpec((cout_p, lanes), lambda g: (0, g)),
            scratch_shapes=[pltpu.VMEM((K * c_max, lanes), jnp.bfloat16)],
        ),
        compiler_params=pltpu.CompilerParams(
            dimension_semantics=("parallel",),
            vmem_limit_bytes=vmem_limit),
    )(x_cl, masks, s1, b1, w1f, b2, w2f, b3, w3f)

    # (Cout_p, grid_len*lanes) -> (N, planes, L)
    out = out_flat.reshape(cout_p, grid_len, lanes)[:planes, :, :b_blk * L]
    out = out.reshape(planes, N, L)
    return jnp.transpose(out, (1, 0, 2)).astype(x.dtype)


# --------------------------- reference & test setup --------------------------

def _fold_bn(gamma, beta, mean, var, eps=1e-5):
    scale = gamma / jnp.sqrt(var + eps)
    shift = beta - mean * scale
    return scale[:, None].astype(jnp.float32), shift[:, None].astype(jnp.float32)


def _ref_conv1d(x, w):
    # x: (N, C, L), w: (Cout, Cin, K), 'same' padding, stride 1 (pure-JAX ref)
    return lax.conv_general_dilated(
        x, w, window_strides=(1,), padding="SAME",
        dimension_numbers=("NCH", "OIH", "NCH"))


def _ref_forward(x, params, res=True):
    h = jnp.maximum(x * params["s1"][None] + params["b1"][None], 0.0)
    h = _ref_conv1d(h, params["w1"])
    h = jnp.maximum(h * params["s2"][None] + params["b2"][None], 0.0)
    h = _ref_conv1d(h, params["w2"])
    h = jnp.maximum(h * params["s3"][None] + params["b3"][None], 0.0)
    h = _ref_conv1d(h, params["w3"])
    if res:
        h = h + x
    return h


def make_params(key, inplanes, planes, size=3):
    eps = 1e-5

    def bn(k, c):
        kg, kb, km, kv = jax.random.split(k, 4)
        gamma = 1.0 + 0.1 * jax.random.normal(kg, (c,), jnp.float32)
        beta = 0.1 * jax.random.normal(kb, (c,), jnp.float32)
        mean = 0.1 * jax.random.normal(km, (c,), jnp.float32)
        var = jnp.abs(1.0 + 0.1 * jax.random.normal(kv, (c,), jnp.float32))
        return _fold_bn(gamma, beta, mean, var, eps)

    kb1, kb2, kb3, kw1, kw2, kw3 = jax.random.split(key, 6)
    s1, b1 = bn(kb1, inplanes)
    s2, b2 = bn(kb2, planes)
    s3, b3 = bn(kb3, planes)

    def conv_w(k, cout, cin):
        bound = 1.0 / float(cin * size) ** 0.5
        return jax.random.uniform(k, (cout, cin, size), jnp.float32, -bound, bound)

    w1 = conv_w(kw1, planes, inplanes)
    w2 = conv_w(kw2, planes, planes)
    w3 = conv_w(kw3, planes, planes)
    return dict(s1=s1, b1=b1, w1=w1, s2=s2, b2=b2, w2=w2, s3=s3, b3=b3, w3=w3)


if __name__ == "__main__":
    key = jax.random.PRNGKey(0)
    N, C, L = 2, 4, 16          # batch, channels (inplanes == planes), length
    kx, kp = jax.random.split(key)
    x = jax.random.normal(kx, (N, C, L), jnp.float32)
    params = make_params(kp, inplanes=C, planes=C, size=3)

    out = basic_block_1d(x, params, res=True)
    out = jax.block_until_ready(out)

    ref = _ref_forward(x, params, res=True)
    assert out.shape == (N, C, L)
    # bf16 activations + bf16 MXU operands -> loose tolerance vs f32 reference.
    assert jnp.allclose(out, ref, atol=5e-2, rtol=5e-2), \
        "mismatch vs pure-JAX reference"
    print("KERNEL_OK")
</pallas_src>

<mosaic_0001>
module attributes {stable_mosaic.version = 11 : i64} {
  func.func @probe(%arg0: memref<8x128xf32, #tpu.memory_space<vmem>>, %arg1: memref<8x128xf32, #tpu.memory_space<vmem>>) attributes {dimension_semantics = [], scalar_prefetch = 0 : i64, scratch_operands = 0 : i64, tpu.core_type = #tpu.core_type<tc>} {
    %c0 = arith.constant 0 : index
    %c0_0 = arith.constant 0 : index
    %0 = vector.load %arg0[%c0, %c0_0] : memref<8x128xf32, #tpu.memory_space<vmem>>, vector<8x128xf32>
    %c1_i32 = arith.constant 1 : i32
    %1 = tpu.dynamic_rotate %0 by %c1_i32 dim 1 : vector<8x128xf32>, i32 -> vector<8x128xf32>
    %c0_1 = arith.constant 0 : index
    %c0_2 = arith.constant 0 : index
    %2 = vector.load %arg1[%c0_1, %c0_2] : memref<8x128xf32, #tpu.memory_space<vmem>>, vector<8x128xf32>
    tpu.vector_store %arg1[%c0_1, %c0_2], %1 {strides = array<i32>} : memref<8x128xf32, #tpu.memory_space<vmem>>, vector<8x128xf32>,
    return
  }
}

</mosaic_0001>

<llo_original>
// kernel: tpu_custom_call.1
$region0: #{tpu_custom_call.1}
  #allocation0 [shape = 'u32[]', space=smem, size = 0x4, offset = 0x4, fixed_abs, tag = 'smem constant byte address 0x4 - core index']
  #allocation1 [shape = 'u32[144,128]{1,0:T(1,128)}', space=vmem, size = 0x12000, scoped, tag = 'internal scratch']
  %s0 = inlined_call_operand.hbm [shape: f32[8,128], index: 0, kind: input, shape index: {}]
  %s1 = inlined_call_operand.hbm [shape: f32[8,128], index: 1, kind: output, shape index: {}]
  %s2 = sld [smem:[#allocation0]]
  $region18: #{tpu_custom_call.1} parent=0
    _
  %s4 = ssub.s32 1, %s2
  %s5 = scalar_select 0, %s4, %s2
  $region1: #{tpu_custom_call.1} parent=0
    #allocation2 [shape = 'u8[4096]{0}', space=vmem, size = 0x1000, scoped, tag = 'input window, operand 0, single buffered']
    #allocation3 [shape = 's32[1]{0}', space=sflag, size = 0x4, scoped, tag = 'scoped memory for tpu_custom_call.1']
    #allocation4 [shape = 's32[1]{0}', space=sflag, size = 0x4, scoped, tag = 'scoped memory for tpu_custom_call.1']
    #allocation5 [shape = 'u8[4096]{0}', space=vmem, size = 0x1000, scoped, tag = 'output window, operand 0, single buffered']
    %6 = vsyncpa [#allocation3], 0
    %7 = vsyncpa [#allocation4], 0
    // Predicated region
    $region2: #{tpu_custom_call.1} parent=1 // pred_check
      _
    $region3: #{tpu_custom_call.1} parent=1 // pred_check_branch
      %9 = sbr.rel (0) target = $region5
    $region4: #{tpu_custom_call.1} parent=1 // pred_region
      %s11 = ssub.s32 128, 128
      %12 = vsyncadd [#allocation3], %s11
      %s14 = sshll.u32 [#allocation2], 4
      %s15 = int_to_ptr.vmem [resolvable:$true] %s14
      %17 = dma.hbm_to_vmem [thread:$0]  %s0, 128, %s15, [#allocation3]
    $region5: #{tpu_custom_call.1} parent=1 // pred_fallthru
      _
    // Predicated region
    $region6: #{tpu_custom_call.1} parent=1 // pred_check
      _
    $region7: #{tpu_custom_call.1} parent=1 // pred_check_branch
      %19 = sbr.rel (0) target = $region9
    $region8: #{tpu_custom_call.1} parent=1 // pred_region
      %20 = dma.done [#allocation3], 128
    $region9: #{tpu_custom_call.1} parent=1 // pred_fallthru
      _
    %v21 = vld [vmem:[#allocation2] sm:$0xff]
    %22 = vrot.lane.b32.xlu0 %v21, 1
    %v23 = vpop.permute.xlu0 %22
    %24 = vst [vmem:[#allocation5] sm:$0xff] %v23
    // Predicated region
    $region10: #{tpu_custom_call.1} parent=1 // pred_check
      _
    $region11: #{tpu_custom_call.1} parent=1 // pred_check_branch
      %26 = sbr.rel (0) target = $region13
    $region12: #{tpu_custom_call.1} parent=1 // pred_region
      %s28 = ssub.s32 128, 128
      %29 = vsyncadd [#allocation4], %s28
      %s31 = sshll.u32 [#allocation5], 4
      %s32 = int_to_ptr.vmem [resolvable:$true] %s31
      %34 = dma.vmem_to_hbm [thread:$0]  %s32, 128, %s1, [#allocation4]
    $region13: #{tpu_custom_call.1} parent=1 // pred_fallthru
      _
    // Predicated region
    $region14: #{tpu_custom_call.1} parent=1 // pred_check
      _
    $region15: #{tpu_custom_call.1} parent=1 // pred_check_branch
      %36 = sbr.rel (0) target = $region17
    $region16: #{tpu_custom_call.1} parent=1 // pred_region
      %37 = dma.done [#allocation4], 128
    $region17: #{tpu_custom_call.1} parent=1 // pred_fallthru
      _
    %38 = vsyncpa [#allocation3], 1
    %39 = vsyncpa [#allocation4], 1

</llo_original>
